<compile_context>
chip_gen: v6e
topology: v6e:2x2x1
jax: 0.10.0
libtpu: 0.0.40
codegen_flags: <defaults>
</compile_context>

<pallas_src>
import math

import jax
import jax.numpy as jnp
from jax import lax
from jax.experimental import pallas as pl
from jax.experimental.pallas import tpu as pltpu


# ---------------------------------------------------------------------------
# Kernels: one (tm, tn) output tile, accumulated over the K grid axis.
# ---------------------------------------------------------------------------
def _linear_bias_kernel(x_ref, w_ref, b_ref, o_ref, acc_ref):
    k = pl.program_id(2)

    @pl.when(k == 0)
    def _():
        # Fold the bias into the accumulator init (applied exactly once).
        acc_ref[...] = b_ref[...] + jnp.zeros_like(acc_ref)

    # x tile: (tm, tk); w tile: (tn, tk) in native (out, in) layout.
    # Contract both on their last axis -> (tm, tn), f32 accumulation on MXU.
    acc_ref[...] += lax.dot_general(
        x_ref[...], w_ref[...],
        dimension_numbers=(((1,), (1,)), ((), ())),
        preferred_element_type=jnp.float32,
    )

    @pl.when(k == pl.num_programs(2) - 1)
    def _():
        o_ref[...] = acc_ref[...].astype(o_ref.dtype)


def _linear_nobias_kernel(x_ref, w_ref, o_ref, acc_ref):
    k = pl.program_id(2)

    @pl.when(k == 0)
    def _():
        acc_ref[...] = jnp.zeros_like(acc_ref)

    acc_ref[...] += lax.dot_general(
        x_ref[...], w_ref[...],
        dimension_numbers=(((1,), (1,)), ((), ())),
        preferred_element_type=jnp.float32,
    )

    @pl.when(k == pl.num_programs(2) - 1)
    def _():
        o_ref[...] = acc_ref[...].astype(o_ref.dtype)


# ---------------------------------------------------------------------------
# Tiling helpers
# ---------------------------------------------------------------------------
def _round_up(x, m):
    return ((x + m - 1) // m) * m


def _pick_divisor_tile(dim_r, cap, lane=128):
    """Largest tile <= cap dividing dim_r (dim_r is a multiple of `lane`)."""
    if dim_r <= cap:
        return dim_r
    t = cap
    while t > lane:
        if dim_r % t == 0:
            return t
        t //= 2
    return lane


def _pick_m_tile(m_r, sub):
    """Pick tm (multiple of `sub`), preferring large tiles with low M padding."""
    if m_r <= 512:
        return m_r
    best_t, best_pad = 512, _round_up(m_r, 512)
    for cand in (256, 128):
        pad = _round_up(m_r, cand)
        if pad < best_pad:
            best_t, best_pad = cand, pad
    return best_t


# ---------------------------------------------------------------------------
# Parameter preparation (done ONCE per layer, not per call)
# ---------------------------------------------------------------------------
def _prepare_params(w, b, compute_dtype):
    out_c, in_c = w.shape
    n_r = _round_up(out_c, 128)
    k_r = _round_up(in_c, 128)
    tn = _pick_divisor_tile(n_r, 512)
    tk = _pick_divisor_tile(k_r, 2048)

    w_p = w
    if compute_dtype is not None and w_p.dtype != compute_dtype:
        w_p = w_p.astype(compute_dtype)
    if (n_r, k_r) != (out_c, in_c):
        # K padding MUST be zeros (it contributes to every valid output row).
        w_p = jnp.pad(w_p, ((0, n_r - out_c), (0, k_r - in_c)))

    b_p = None
    if b is not None:
        b_p = b.astype(jnp.float32).reshape(1, out_c)
        if n_r != out_c:
            b_p = jnp.pad(b_p, ((0, 0), (0, n_r - out_c)))
    return w_p, b_p, tn, tk


# ---------------------------------------------------------------------------
# Core apply (expects a lane-aligned, pre-padded weight / bias)
# ---------------------------------------------------------------------------
def _linear_apply(x, w_p, b_p, in_channels, out_channels, tn, tk,
                  compute_dtype):
    orig_shape = x.shape
    assert orig_shape[-1] == in_channels
    n_pad, k_pad = w_p.shape

    m = 1
    for d in orig_shape[:-1]:
        m *= d
    x2d = x.reshape(m, in_channels)

    cdtype = compute_dtype if compute_dtype is not None else x.dtype
    if x2d.dtype != cdtype:
        x2d = x2d.astype(cdtype)
    if w_p.dtype != cdtype:          # rare mixed-dtype corner case
        w_p = w_p.astype(cdtype)

    itemsize = jnp.dtype(cdtype).itemsize
    sub = 16 if itemsize == 2 else 8              # bf16 packs 2 rows/sublane

    m_r = _round_up(max(m, 1), sub)
    tm = _pick_m_tile(m_r, sub)
    m_pad = _round_up(m_r, tm)

    # v7x has 2 TensorCores sharded over the "parallel" axes: avoid a single
    # parallel block when it can be cleanly split (no effect on v5e/v6e).
    if (m_pad // tm) * (n_pad // tn) == 1:
        if tn >= 256 and tn % 256 == 0:
            tn //= 2
        elif tm >= 2 * sub and tm % (2 * sub) == 0:
            tm //= 2

    # Zero-pad x only when needed (K padding must be zeros; padded M rows are
    # discarded after the kernel).
    if (m_pad, k_pad) != (m, in_channels):
        x2d = jnp.pad(x2d, ((0, m_pad - m), (0, k_pad - in_channels)))

    grid = (m_pad // tm, n_pad // tn, k_pad // tk)
    out_dtype = x.dtype
    out_shape = jax.ShapeDtypeStruct((m_pad, n_pad), out_dtype)
    out_itemsize = jnp.dtype(out_dtype).itemsize

    x_spec = pl.BlockSpec((tm, tk), lambda i, j, k: (i, k))
    w_spec = pl.BlockSpec((tn, tk), lambda i, j, k: (j, k))
    o_spec = pl.BlockSpec((tm, tn), lambda i, j, k: (i, j))
    scratch = [pltpu.VMEM((tm, tn), jnp.float32)]

    # VMEM budget: double-buffered inputs/outputs + f32 accumulator, with
    # headroom; >=32 MiB (unlocks larger tiles on v5e's 16 MiB default scope),
    # <=56 MiB (stays inside v7x's 64 MiB physical VMEM per TensorCore).
    vmem_est = (2 * (tm * tk + tn * tk) * itemsize
                + 2 * tm * tn * out_itemsize
                + tm * tn * 4 + 8 * tn)
    vmem_limit = int(min(max(vmem_est + (8 << 20), 32 << 20), 56 << 20))
    cparams = pltpu.CompilerParams(
        dimension_semantics=("parallel", "parallel", "arbitrary"),
        vmem_limit_bytes=vmem_limit,
    )
    cost = pl.CostEstimate(
        flops=2 * m_pad * n_pad * k_pad,
        transcendentals=0,
        bytes_accessed=(m_pad * k_pad * itemsize + n_pad * k_pad * itemsize
                        + m_pad * n_pad * out_itemsize
                        + (n_pad * 4 if b_p is not None else 0)),
    )

    if b_p is not None:
        b_spec = pl.BlockSpec((1, tn), lambda i, j, k: (0, j))
        out2d = pl.pallas_call(
            _linear_bias_kernel,
            out_shape=out_shape,
            grid_spec=pltpu.PrefetchScalarGridSpec(
                num_scalar_prefetch=0,
                grid=grid,
                in_specs=[x_spec, w_spec, b_spec],
                out_specs=o_spec,
                scratch_shapes=scratch,
            ),
            compiler_params=cparams,
            cost_estimate=cost,
        )(x2d, w_p, b_p)
    else:
        out2d = pl.pallas_call(
            _linear_nobias_kernel,
            out_shape=out_shape,
            grid_spec=pltpu.PrefetchScalarGridSpec(
                num_scalar_prefetch=0,
                grid=grid,
                in_specs=[x_spec, w_spec],
                out_specs=o_spec,
                scratch_shapes=scratch,
            ),
            compiler_params=cparams,
            cost_estimate=cost,
        )(x2d, w_p)

    # Slice off padding only when there is any (skip the extra HBM pass).
    if (m_pad, n_pad) != (m, out_channels):
        out2d = out2d[:m, :out_channels]
    return out2d.reshape(orig_shape[:-1] + (out_channels,))


# ---------------------------------------------------------------------------
# Public API
# ---------------------------------------------------------------------------
class PallasLinear:
    """Holds the weight/bias pre-padded & pre-cast once (cheap forward)."""

    def __init__(self, w, b=None, *, compute_dtype=None):
        self.out_channels, self.in_channels = w.shape
        self.compute_dtype = compute_dtype
        self.w_p, self.b_p, self.tn, self.tk = _prepare_params(
            w, b, compute_dtype)

    def __call__(self, x):
        return _linear_apply(x, self.w_p, self.b_p, self.in_channels,
                             self.out_channels, self.tn, self.tk,
                             self.compute_dtype)


def linear_forward(x, w, b=None, *, compute_dtype=None):
    """Functional form: out = x @ w.T (+ b)."""
    out_c, in_c = w.shape
    w_p, b_p, tn, tk = _prepare_params(w, b, compute_dtype)
    return _linear_apply(x, w_p, b_p, in_c, out_c, tn, tk, compute_dtype)


# ---------------------------------------------------------------------------
# Param init (matches torch: uniform in [-sqrt(1/in), sqrt(1/in)))
# ---------------------------------------------------------------------------
def init_linear_params(key, in_channels, out_channels, bias=True,
                       dtype=jnp.float32):
    k = 1.0 / in_channels
    bound = math.sqrt(k)
    kw, kb = jax.random.split(key)
    w = jax.random.uniform(kw, (out_channels, in_channels), dtype=dtype,
                           minval=-bound, maxval=bound)
    b = None
    if bias:
        b = jax.random.uniform(kb, (out_channels,), dtype=dtype,
                               minval=-bound, maxval=bound)
    return w, b


if __name__ == "__main__":
    key = jax.random.PRNGKey(0)
    k_x, k_p, k_x2 = jax.random.split(key, 3)

    # --- Small shapes matching the module's demo (odd, non-aligned dims) ---
    N, S, in_channels, out_channels = 2, 4, 32, 48
    x = jax.random.normal(k_x, (N, S, in_channels), dtype=jnp.float32)
    w, b = init_linear_params(k_p, in_channels, out_channels, bias=True)

    layer = PallasLinear(w, b)                      # weight prepared once
    out = jax.block_until_ready(layer(x))
    ref = jnp.matmul(x, w.T) + b
    assert out.shape == (N, S, out_channels)
    assert jnp.allclose(out, ref, atol=1e-5, rtol=1e-5)

    # --- 2-D input path and no-bias path (functional API) ---
    x2 = jax.random.normal(k_x2, (8, in_channels), dtype=jnp.float32)
    out2 = jax.block_until_ready(linear_forward(x2, w, b))
    assert jnp.allclose(out2, x2 @ w.T + b, atol=1e-5, rtol=1e-5)
    out3 = jax.block_until_ready(linear_forward(x2, w, None))
    assert jnp.allclose(out3, x2 @ w.T, atol=1e-5, rtol=1e-5)

    # --- Multi-tile case (exercises 3-D grid, padding, bias fold) ----------
    N2, S2, in2, out2c = 2, 300, 320, 384
    kw2 = jax.random.fold_in(key, 1)
    xb = jax.random.normal(jax.random.fold_in(key, 2), (N2, S2, in2),
                           dtype=jnp.float32)
    wb, bb = init_linear_params(kw2, in2, out2c, bias=True)
    outb = jax.block_until_ready(PallasLinear(wb, bb)(xb))
    refb = jnp.matmul(xb, wb.T) + bb
    assert outb.shape == (N2, S2, out2c)
    assert jnp.allclose(outb, refb, atol=1e-4, rtol=1e-4)

    # --- bf16 operand streaming (f32 accumulation), looser tolerance -------
    layer_bf16 = PallasLinear(wb, bb, compute_dtype=jnp.bfloat16)
    out_bf16 = jax.block_until_ready(layer_bf16(xb))
    rel_err = jnp.linalg.norm(out_bf16.astype(jnp.float32) - refb) \
        / jnp.linalg.norm(refb)
    assert rel_err < 2e-2

    print("KERNEL_OK")
</pallas_src>

<mosaic_0001>
module attributes {stable_mosaic.version = 11 : i64} {
  func.func @_linear_bias_kernel(%arg0: i32, %arg1: i32, %arg2: i32, %arg3: memref<8x128xf32, #tpu.memory_space<vmem>>, %arg4: memref<128x128xf32, #tpu.memory_space<vmem>>, %arg5: memref<1x128xf32, #tpu.memory_space<vmem>>, %arg6: memref<8x128xf32, #tpu.memory_space<vmem>>, %arg7: memref<8x128xf32, #tpu.memory_space<vmem>>) attributes {dimension_semantics = [#tpu.dimension_semantics<parallel>, #tpu.dimension_semantics<parallel>, #tpu.dimension_semantics<arbitrary>], iteration_bounds = array<i64: 1, 1, 1>, scalar_prefetch = 0 : i64, scratch_operands = 1 : i64, tpu.core_type = #tpu.core_type<tc>, window_params = [{transform_indices = @transform_0, window_bounds = array<i64: 8, 128>}, {transform_indices = @transform_1, window_bounds = array<i64: 128, 128>}, {transform_indices = @transform_2, window_bounds = array<i64: 1, 128>}, {transform_indices = @transform_3, window_bounds = array<i64: 8, 128>}]} {
    %c0_i32 = arith.constant 0 : i32
    %0 = arith.cmpi eq, %arg2, %c0_i32 : i32
    %1 = arith.extui %0 : i1 to i32
    %c0_i32_0 = arith.constant 0 : i32
    %2 = arith.cmpi ne, %1, %c0_i32_0 : i32
    scf.if %2 {
      %c0_10 = arith.constant 0 : index
      %c0_11 = arith.constant 0 : index
      %12 = vector.load %arg5[%c0_10, %c0_11] : memref<1x128xf32, #tpu.memory_space<vmem>>, vector<1x128xf32>
      %cst_12 = arith.constant 0.000000e+00 : f32
      %13 = vector.broadcast %cst_12 : f32 to vector<8x128xf32>
      %14 = vector.broadcast %12 : vector<1x128xf32> to vector<8x128xf32>
      %15 = arith.addf %14, %13 : vector<8x128xf32>
      %c0_13 = arith.constant 0 : index
      %c0_14 = arith.constant 0 : index
      %16 = vector.load %arg7[%c0_13, %c0_14] : memref<8x128xf32, #tpu.memory_space<vmem>>, vector<8x128xf32>
      tpu.vector_store %arg7[%c0_13, %c0_14], %15 {strides = array<i32>} : memref<8x128xf32, #tpu.memory_space<vmem>>, vector<8x128xf32>,
    } else {
    }
    %c0 = arith.constant 0 : index
    %c0_1 = arith.constant 0 : index
    %3 = vector.load %arg7[%c0, %c0_1] : memref<8x128xf32, #tpu.memory_space<vmem>>, vector<8x128xf32>
    %c0_2 = arith.constant 0 : index
    %c0_3 = arith.constant 0 : index
    %4 = vector.load %arg3[%c0_2, %c0_3] : memref<8x128xf32, #tpu.memory_space<vmem>>, vector<8x128xf32>
    %c0_4 = arith.constant 0 : index
    %c0_5 = arith.constant 0 : index
    %5 = vector.load %arg4[%c0_4, %c0_5] : memref<128x128xf32, #tpu.memory_space<vmem>>, vector<128x128xf32>
    %cst = arith.constant dense<0.000000e+00> : vector<8x128xf32>
    %6 = tpu.matmul %4, %5, %cst {dimension_numbers = #tpu.dot_dimension_numbers<[1], [1], [0], [0], [0, 0, 1, 0], [], []>} : vector<8x128xf32>, vector<128x128xf32>, vector<8x128xf32> -> vector<8x128xf32>
    %7 = arith.addf %3, %6 : vector<8x128xf32>
    %c0_6 = arith.constant 0 : index
    %c0_7 = arith.constant 0 : index
    %8 = vector.load %arg7[%c0_6, %c0_7] : memref<8x128xf32, #tpu.memory_space<vmem>>, vector<8x128xf32>
    tpu.vector_store %arg7[%c0_6, %c0_7], %7 {strides = array<i32>} : memref<8x128xf32, #tpu.memory_space<vmem>>, vector<8x128xf32>,
    %c0_i32_8 = arith.constant 0 : i32
    %9 = arith.cmpi eq, %arg2, %c0_i32_8 : i32
    %10 = arith.extui %9 : i1 to i32
    %c0_i32_9 = arith.constant 0 : i32
    %11 = arith.cmpi ne, %10, %c0_i32_9 : i32
    scf.if %11 {
      %c0_10 = arith.constant 0 : index
      %c0_11 = arith.constant 0 : index
      %12 = vector.load %arg7[%c0_10, %c0_11] : memref<8x128xf32, #tpu.memory_space<vmem>>, vector<8x128xf32>
      %c0_12 = arith.constant 0 : index
      %c0_13 = arith.constant 0 : index
      %13 = vector.load %arg6[%c0_12, %c0_13] : memref<8x128xf32, #tpu.memory_space<vmem>>, vector<8x128xf32>
      tpu.vector_store %arg6[%c0_12, %c0_13], %12 {strides = array<i32>} : memref<8x128xf32, #tpu.memory_space<vmem>>, vector<8x128xf32>,
    } else {
    }
    return
  }
  func.func @transform_0(%arg0: i32, %arg1: i32, %arg2: i32) -> (i32, i32) {
    %c0_i32 = arith.constant 0 : i32
    return %arg0, %arg2 : i32, i32
  }
  func.func @transform_1(%arg0: i32, %arg1: i32, %arg2: i32) -> (i32, i32) {
    %c0_i32 = arith.constant 0 : i32
    return %arg1, %arg2 : i32, i32
  }
  func.func @transform_2(%arg0: i32, %arg1: i32, %arg2: i32) -> (i32, i32) {
    %c0_i32 = arith.constant 0 : i32
    %c0_i32_0 = arith.constant 0 : i32
    return %c0_i32, %arg1 : i32, i32
  }
  func.func @transform_3(%arg0: i32, %arg1: i32, %arg2: i32) -> (i32, i32) {
    %c0_i32 = arith.constant 0 : i32
    return %arg0, %arg1 : i32, i32
  }
}

</mosaic_0001>

<llo_original>
// kernel: tpu_custom_call.1
$region0: #{tpu_custom_call.1}
  #allocation0 [shape = 'u32[]', space=smem, size = 0x4, offset = 0x4, fixed_abs, tag = 'smem constant byte address 0x4 - core index']
  #allocation1 [shape = 'u32[144,128]{1,0:T(1,128)}', space=vmem, size = 0x12000, scoped, tag = 'internal scratch']
  #allocation2 [shape = 'f32[8,128]{1,0:T(8,128)}', space=vmem, size = 0x1000, scoped, tag = 'scratch operand']
  %s0 = inlined_call_operand.hbm [shape: f32[8,128], index: 0, kind: input, shape index: {}]
  %s1 = inlined_call_operand.hbm [shape: f32[128,128], index: 1, kind: input, shape index: {}]
  %s2 = inlined_call_operand.vmem [shape: f32[1,128], index: 2, kind: input, shape index: {}]
  %s3 = inlined_call_operand.hbm [shape: f32[8,128], index: 3, kind: output, shape index: {}]
  %s4 = sld [smem:[#allocation0]]
  $region38: #{tpu_custom_call.1} parent=0
    _
  %s6 = ssub.s32 1, %s4
  %s7 = scalar_select 0, %s6, %s4
  $region1: #{tpu_custom_call.1} parent=0
    #allocation3 [shape = 'u8[4096]{0}', space=vmem, size = 0x1000, scoped, tag = 'input window, operand 0, single buffered']
    #allocation4 [shape = 's32[1]{0}', space=sflag, size = 0x4, scoped, tag = 'scoped memory for tpu_custom_call.1']
    #allocation5 [shape = 's32[1]{0}', space=sflag, size = 0x4, scoped, tag = 'scoped memory for tpu_custom_call.1']
    #allocation6 [shape = 'u8[65536]{0}', space=vmem, size = 0x10000, scoped, tag = 'input window, operand 1, single buffered']
    #allocation7 [shape = 's32[1]{0}', space=sflag, size = 0x4, scoped, tag = 'scoped memory for tpu_custom_call.1']
    #allocation8 [shape = 'u8[4096]{0}', space=vmem, size = 0x1000, scoped, tag = 'output window, operand 0, single buffered']
    %8 = vsyncpa [#allocation4], 0
    %9 = vsyncpa [#allocation7], 0
    %10 = vsyncpa [#allocation5], 0
    // Predicated region
    $region2: #{tpu_custom_call.1} parent=1 // pred_check
      _
    $region3: #{tpu_custom_call.1} parent=1 // pred_check_branch
      %12 = sbr.rel (0) target = $region5
    $region4: #{tpu_custom_call.1} parent=1 // pred_region
      %s14 = ssub.s32 128, 128
      %15 = vsyncadd [#allocation4], %s14
      %s17 = sshll.u32 [#allocation3], 4
      %s18 = int_to_ptr.vmem [resolvable:$true] %s17
      %20 = dma.hbm_to_vmem [thread:$0]  %s0, 128, %s18, [#allocation4]
    $region5: #{tpu_custom_call.1} parent=1 // pred_fallthru
      _
    // Predicated region
    $region6: #{tpu_custom_call.1} parent=1 // pred_check
      _
    $region7: #{tpu_custom_call.1} parent=1 // pred_check_branch
      %22 = sbr.rel (0) target = $region9
    $region8: #{tpu_custom_call.1} parent=1 // pred_region
      %s24 = ssub.s32 2048, 2048
      %25 = vsyncadd [#allocation7], %s24
      %s26 = sshll.u32 [#allocation6], 4
      %s27 = int_to_ptr.vmem [resolvable:$true] %s26
      %32 = dma.hbm_to_vmem [thread:$0]  %s1, 2048, %s27, [#allocation7], 128, 128, 8
    $region9: #{tpu_custom_call.1} parent=1 // pred_fallthru
      _
    // Predicated region
    $region10: #{tpu_custom_call.1} parent=1 // pred_check
      _
    $region11: #{tpu_custom_call.1} parent=1 // pred_check_branch
      %34 = sbr.rel (0) target = $region13
    $region12: #{tpu_custom_call.1} parent=1 // pred_region
      _
    $region13: #{tpu_custom_call.1} parent=1 // pred_fallthru
      _
    // Predicated region
    $region14: #{tpu_custom_call.1} parent=1 // pred_check
      _
    $region15: #{tpu_custom_call.1} parent=1 // pred_check_branch
      %36 = sbr.rel (0) target = $region17
    $region16: #{tpu_custom_call.1} parent=1 // pred_region
      %37 = dma.done [#allocation4], 128
    $region17: #{tpu_custom_call.1} parent=1 // pred_fallthru
      _
    // Predicated region
    $region18: #{tpu_custom_call.1} parent=1 // pred_check
      _
    $region19: #{tpu_custom_call.1} parent=1 // pred_check_branch
      %39 = sbr.rel (0) target = $region21
    $region20: #{tpu_custom_call.1} parent=1 // pred_region
      %40 = dma.done [#allocation7], 2048
    $region21: #{tpu_custom_call.1} parent=1 // pred_fallthru
      _
    %p41 = scmp.eq.s32.totalorder 0, 0
    // Predicated region
    $region22: #{tpu_custom_call.1} parent=1 // pred_check
      %p42 = pneg %p41
    $region23: #{tpu_custom_call.1} parent=1 // pred_check_branch
      %44 = sbr.rel (%p42) target = $region25
    $region24: #{tpu_custom_call.1} parent=1 // pred_region
      %v45 = vld [vmem:[%s2] sm:$0x1]
      %v47 = vlaneseq
      %v48 = vshrl.u32 %v47, 7
      %v49 = vsub.s32 0, %v48
      %v50 = vrot.slane %v45, %v49
      %v52 = vadd.f32 %v50, 0.0
      %53 = vst [vmem:[#allocation2] sm:$0xff] %v52
    $region25: #{tpu_custom_call.1} parent=1 // pred_fallthru
      _
    %v54 = vld [vmem:[#allocation2] sm:$0xff]
    %v55 = vld [vmem:[#allocation3] sm:$0xff]
    %v56 = vld [vmem:[#allocation6] sm:$0xff]
    %v57 = vld [vmem:[#allocation6 + $0x8] sm:$0xff]
    %v58 = vld [vmem:[#allocation6 + $0x10] sm:$0xff]
    %v59 = vld [vmem:[#allocation6 + $0x18] sm:$0xff]
    %v60 = vld [vmem:[#allocation6 + $0x20] sm:$0xff]
    %v61 = vld [vmem:[#allocation6 + $0x28] sm:$0xff]
    %v62 = vld [vmem:[#allocation6 + $0x30] sm:$0xff]
    %v63 = vld [vmem:[#allocation6 + $0x38] sm:$0xff]
    %v64 = vld [vmem:[#allocation6 + $0x40] sm:$0xff]
    %v65 = vld [vmem:[#allocation6 + $0x48] sm:$0xff]
    %v66 = vld [vmem:[#allocation6 + $0x50] sm:$0xff]
    %v67 = vld [vmem:[#allocation6 + $0x58] sm:$0xff]
    %v68 = vld [vmem:[#allocation6 + $0x60] sm:$0xff]
    %v69 = vld [vmem:[#allocation6 + $0x68] sm:$0xff]
    %v70 = vld [vmem:[#allocation6 + $0x70] sm:$0xff]
    %v71 = vld [vmem:[#allocation6 + $0x78] sm:$0xff]
    %72 = vmatprep.subr.mxu0 0.0
    %73 = vmatpush1.xpose.msra.mxu0 %v71
    %74 = vmatprep.subr.mxu0 0.0
    %75 = vmatpush1.xpose.msra.mxu0 %v70
    %76 = vmatprep.subr.mxu0 0.0
    %77 = vmatpush1.xpose.msra.mxu0 %v69
    %78 = vmatprep.subr.mxu0 0.0
    %79 = vmatpush1.xpose.msra.mxu0 %v68
    %80 = vmatprep.subr.mxu0 0.0
    %81 = vmatpush1.xpose.msra.mxu0 %v67
    %82 = vmatprep.subr.mxu0 0.0
    %83 = vmatpush1.xpose.msra.mxu0 %v66
    %84 = vmatprep.subr.mxu0 0.0
    %85 = vmatpush1.xpose.msra.mxu0 %v65
    %86 = vmatprep.subr.mxu0 0.0
    %87 = vmatpush1.xpose.msra.mxu0 %v64
    %88 = vmatprep.subr.mxu0 0.0
    %89 = vmatpush1.xpose.msra.mxu0 %v63
    %90 = vmatprep.subr.mxu0 0.0
    %91 = vmatpush1.xpose.msra.mxu0 %v62
    %92 = vmatprep.subr.mxu0 0.0
    %93 = vmatpush1.xpose.msra.mxu0 %v61
    %94 = vmatprep.subr.mxu0 0.0
    %95 = vmatpush1.xpose.msra.mxu0 %v60
    %96 = vmatprep.subr.mxu0 0.0
    %97 = vmatpush1.xpose.msra.mxu0 %v59
    %98 = vmatprep.subr.mxu0 0.0
    %99 = vmatpush1.xpose.msra.mxu0 %v58
    %100 = vmatprep.subr.mxu0 0.0
    %101 = vmatpush1.xpose.msra.mxu0 %v57
    %102 = vmatprep.subr.mxu0 0.0
    %103 = vmatpush1.xpose.msra.mxu0 %v56
    %104 = vmatprep.subr.mxu0 0.0
    %105 = vmatpush2.xpose.msra.mxu0 0.0
    %106 = vmatprep.subr.mxu0 0.0
    %107 = vmatpush2.xpose.msra.mxu0 0.0
    %108 = vmatprep.subr.mxu0 0.0
    %109 = vmatpush2.xpose.msra.mxu0 0.0
    %110 = vmatprep.subr.mxu0 0.0
    %111 = vmatpush2.xpose.msra.mxu0 0.0
    %112 = vmatprep.subr.mxu0 0.0
    %113 = vmatpush2.xpose.msra.mxu0 0.0
    %114 = vmatprep.subr.mxu0 0.0
    %115 = vmatpush2.xpose.msra.mxu0 0.0
    %116 = vmatprep.subr.mxu0 0.0
    %117 = vmatpush2.xpose.msra.mxu0 0.0
    %118 = vmatprep.subr.mxu0 0.0
    %119 = vmatpush2.xpose.msra.mxu0 0.0
    %120 = vmatprep.subr.mxu0 0.0
    %121 = vmatpush2.xpose.msra.mxu0 0.0
    %122 = vmatprep.subr.mxu0 0.0
    %123 = vmatpush2.xpose.msra.mxu0 0.0
    %124 = vmatprep.subr.mxu0 0.0
    %125 = vmatpush2.xpose.msra.mxu0 0.0
    %126 = vmatprep.subr.mxu0 0.0
    %127 = vmatpush2.xpose.msra.mxu0 0.0
    %128 = vmatprep.subr.mxu0 0.0
    %129 = vmatpush2.xpose.msra.mxu0 0.0
    %130 = vmatprep.subr.mxu0 0.0
    %131 = vmatpush2.xpose.msra.mxu0 0.0
    %132 = vmatprep.subr.mxu0 0.0
    %133 = vmatpush2.xpose.msra.mxu0 0.0
    %134 = vmatprep.subr.mxu0 0.0
    %135 = vmatpush2.xpose.msra.mxu0 0.0
    %136 = vmatprep.mubr.f32.mxu0 0.0
    %137 = vmatmul.mubr.f32.gmra.mxu0 %v55
    %v138 = vpop.f32.mrf.mxu0
    %v139 = vadd.f32 0.0, %v138
    %v140 = vpop.f32.mrf.mxu0
    %141 = vdwg.mxu0
    %v142 = vadd.f32 %v54, %v139
    %143 = vst [vmem:[#allocation2] sm:$0xff] %v142
    // Predicated region
    $region26: #{tpu_custom_call.1} parent=1 // pred_check
      %p144 = pneg %p41
    $region27: #{tpu_custom_call.1} parent=1 // pred_check_branch
      %146 = sbr.rel (%p144) target = $region29
    $region28: #{tpu_custom_call.1} parent=1 // pred_region
      %v147 = vld [vmem:[#allocation2] sm:$0xff]
      %148 = vst [vmem:[#allocation8] sm:$0xff] %v147
    $region29: #{tpu_custom_call.1} parent=1 // pred_fallthru
      _
    // Predicated region
    $region30: #{tpu_custom_call.1} parent=1 // pred_check
      _
    $region31: #{tpu_custom_call.1} parent=1 // pred_check_branch
      %150 = sbr.rel (0) target = $region33
    $region32: #{tpu_custom_call.1} parent=1 // pred_region
      %s152 = ssub.s32 128, 128
      %153 = vsyncadd [#allocation5], %s152
      %s155 = sshll.u32 [#allocation8], 4
      %s156 = int_to_ptr.vmem [resolvable:$true] %s155
      %158 = dma.vmem_to_hbm [thread:$0]  %s156, 128, %s3, [#allocation5]
    $region33: #{tpu_custom_call.1} parent=1 // pred_fallthru
      _
    // Predicated region
    $region34: #{tpu_custom_call.1} parent=1 // pred_check
      _
    $region35: #{tpu_custom_call.1} parent=1 // pred_check_branch
      %160 = sbr.rel (0) target = $region37
    $region36: #{tpu_custom_call.1} parent=1 // pred_region
      %161 = dma.done [#allocation5], 128
    $region37: #{tpu_custom_call.1} parent=1 // pred_fallthru
      _
    %162 = vsyncpa [#allocation4], 1
    %163 = vsyncpa [#allocation7], 1
    %164 = vsyncpa [#allocation5], 1

</llo_original>
